<compile_context>
chip_gen: v5e
topology: v5e:2x2
jax: 0.10.0
libtpu: 0.0.40
codegen_flags: <defaults>
</compile_context>

<pallas_src>
import math

import jax
import jax.numpy as jnp
from jax.experimental import pallas as pl
from jax.experimental.pallas import tpu as pltpu


def make_positional_encoding(embed_dim: int, max_len: int = 5000,
                             dtype=jnp.float32) -> jnp.ndarray:
    """Deterministic sinusoidal table, identical to the PyTorch __init__.

    Built (and cast) once at init so the forward pass never pays a cast.
    """
    position = jnp.arange(0, max_len, dtype=jnp.float32)[:, None]            # (max_len, 1)
    div_term = jnp.exp(
        jnp.arange(0, embed_dim, 2, dtype=jnp.float32)
        * (-math.log(10000.0) / embed_dim)
    )                                                                         # (ceil(D/2),)
    angles = position * div_term                                              # (max_len, ceil(D/2))
    pe = jnp.zeros((max_len, embed_dim), dtype=jnp.float32)
    pe = pe.at[:, 0::2].set(jnp.sin(angles))
    pe = pe.at[:, 1::2].set(jnp.cos(angles)[:, : embed_dim // 2])
    return pe[None, :, :].astype(dtype)                                       # (1, max_len, D)


def _add_pe_kernel(x_ref, pe_ref, o_ref):
    # x/o blocks: (B or 1, TR, L); pe block: (1, TR, L) broadcast over batch.
    o_ref[...] = x_ref[...] + pe_ref[...]


def _block_budget_and_vmem_limit():
    """Chip-aware block budget and scoped-VMEM limit."""
    try:
        vmem_bytes = int(pltpu.get_tpu_info().vmem_capacity_bytes)
    except Exception:
        vmem_bytes = 64 * 1024 * 1024  # conservative (v7x physical VMEM)
    # ~vmem/32 per block: ~4 MiB on v5e/v6e (128 MiB VMEM), ~2 MiB on v7x.
    budget = max(1 << 20, min(4 << 20, vmem_bytes // 32))
    # 3 operands x double-buffering needs ~6x block; v5e's 16 MiB scoped
    # default is too small for >2.5 MiB blocks, so raise the limit explicitly
    # while keeping headroom on every generation.
    vmem_limit = int(min(vmem_bytes // 2, 64 * 1024 * 1024))
    return budget, vmem_limit


def _lane_dense_plane(N: int):
    """(R, L) with R*L == N and L a multiple of 128, or None if impossible."""
    if N % 128 != 0:
        return None
    for L in (1024, 512, 256, 128):
        if N % L == 0:
            return N // L, L
    return N // 128, 128


def _pick_row_tile(R: int, row_bytes: int, target_block_bytes: int) -> int:
    """Largest multiple-of-8 divisor of R fitting the budget (or full R)."""
    max_rows = max(1, target_block_bytes // max(row_bytes, 1))
    if R <= max_rows:
        tr = R
    else:
        tr = None
        t = (min(R, max_rows) // 8) * 8
        while t >= 8:
            if R % t == 0:
                tr = t
                break
            t -= 8
        if tr is None:
            tr = 8 if R % 8 == 0 else R
    # v7x has 2 TensorCores: keep >= 2 tiles along the parallel row axis when
    # the plane is big enough to split on (8, *)-aligned boundaries.
    if tr == R and R >= 16:
        t = ((R // 2) // 8) * 8
        while t >= 8:
            if R % t == 0:
                tr = t
                break
            t -= 8
    return tr


def positional_encoding_forward(x: jnp.ndarray, pe: jnp.ndarray, *,
                                min_pallas_bytes: int = 256 * 1024,
                                donate_x: bool = False) -> jnp.ndarray:
    """x: (B, S, D); pe: (1, max_len, D).  Returns x + pe[:, :S, :]."""
    B, S, D = x.shape
    pe_slice = pe[0, :S, :]                                     # static slice of the buffer
    if pe_slice.dtype != x.dtype:
        # Only runs if the table was not pre-built in the activation dtype.
        # TODO(synk): bit-matching PyTorch's half+float32 promotion would need
        # an f32-accumulated add; difference is negligible for a PE table.
        pe_slice = pe_slice.astype(x.dtype)

    itemsize = jnp.dtype(x.dtype).itemsize
    if B * S * D * itemsize < min_pallas_bytes:
        # Tiny problem: pallas_call launch/pipeline setup dwarfs data movement.
        return x + pe_slice[None]

    budget, vmem_limit = _block_budget_and_vmem_limit()

    # ---- choose a lane-dense (R, L) view of the (S, D) plane ---------------
    N = S * D
    S_pad = S
    plane = _lane_dense_plane(N)
    if plane is None:
        # Pad S so the flattened plane becomes a multiple of 128 lanes (full
        # `vst` stores instead of masked partials), only if the pad is cheap.
        unit = 128 // math.gcd(D, 128)
        cand = -(-S // unit) * unit
        if (cand - S) * 8 <= cand:            # pad fraction <= 1/8
            S_pad = cand
            plane = _lane_dense_plane(S_pad * D)

    if plane is not None:
        R, L = plane
        if S_pad != S:
            x_view = jnp.pad(x, ((0, 0), (0, S_pad - S), (0, 0)))
            pe_view = jnp.pad(pe_slice, ((0, S_pad - S), (0, 0)))
        else:
            x_view, pe_view = x, pe_slice
        # Pure layout plumbing: contiguous row-major reshape -> bitcast.
        x_in = x_view.reshape(B, R, L)
        pe_in = pe_view.reshape(1, R, L)
    else:
        R, L = S, D                            # fallback: full-extent blocks
        x_in, pe_in = x, pe_slice[None]

    # ---- grid / BlockSpecs ---------------------------------------------------
    row_bytes_folded = B * L * itemsize
    fold_batch = 8 * row_bytes_folded <= 4 * budget
    if fold_batch:
        TR = _pick_row_tile(R, row_bytes_folded, budget)
        grid = (R // TR,)
        x_spec = pl.BlockSpec((B, TR, L), lambda r: (0, r, 0))
        pe_spec = pl.BlockSpec((1, TR, L), lambda r: (0, r, 0))
        out_spec = pl.BlockSpec((B, TR, L), lambda r: (0, r, 0))
        dims = ("parallel",)
    else:
        # Very large batch: per-batch blocks, row axis outermost so pe's block
        # index is constant across the inner batch loop (DMA'd once per tile).
        TR = _pick_row_tile(R, L * itemsize, budget)
        grid = (R // TR, B)
        x_spec = pl.BlockSpec((1, TR, L), lambda r, b: (b, r, 0))
        pe_spec = pl.BlockSpec((1, TR, L), lambda r, b: (0, r, 0))
        out_spec = pl.BlockSpec((1, TR, L), lambda r, b: (b, r, 0))
        dims = ("parallel", "parallel")

    out = pl.pallas_call(
        _add_pe_kernel,
        out_shape=jax.ShapeDtypeStruct(x_in.shape, x.dtype),
        grid_spec=pltpu.PrefetchScalarGridSpec(
            num_scalar_prefetch=0,
            grid=grid,
            in_specs=[x_spec, pe_spec],
            out_specs=out_spec,
        ),
        compiler_params=pltpu.CompilerParams(
            dimension_semantics=dims,
            vmem_limit_bytes=vmem_limit,
        ),
        input_output_aliases=({0: 0} if donate_x else {}),
    )(x_in, pe_in)

    if plane is not None:
        out = out.reshape(B, S_pad, D)
        if S_pad != S:
            out = out[:, :S, :]
    return out


if __name__ == "__main__":
    key = jax.random.PRNGKey(0)

    # 1) Shapes implied by the module's forward (batch=2, seq=8, embed=32).
    #    Force the Pallas path to exercise the kernel itself.
    B, S, D = 2, 8, 32
    x = jax.random.normal(key, (B, S, D), dtype=jnp.float32)
    pe = make_positional_encoding(D, max_len=64, dtype=x.dtype)
    out = positional_encoding_forward(x, pe, min_pallas_bytes=0)
    jax.block_until_ready(out)
    ref = x + pe[:, :S, :]
    assert out.shape == (B, S, D)
    assert jnp.allclose(out, ref, atol=1e-6, rtol=1e-6)

    # 2) Multi-tile lane-dense path: grid > 1, pe broadcast over batch-folded blocks.
    B2, S2, D2 = 2, 128, 128
    x2 = jax.random.normal(jax.random.PRNGKey(1), (B2, S2, D2), dtype=jnp.float32)
    pe2 = make_positional_encoding(D2, max_len=256, dtype=x2.dtype)
    out2 = positional_encoding_forward(x2, pe2, min_pallas_bytes=0)
    jax.block_until_ready(out2)
    assert jnp.allclose(out2, x2 + pe2[:, :S2, :], atol=1e-6, rtol=1e-6)

    # 3) S*D not a multiple of 128, large S -> cheap S padding makes it lane-dense.
    B3, S3, D3 = 2, 250, 20
    x3 = jax.random.normal(jax.random.PRNGKey(2), (B3, S3, D3), dtype=jnp.float32)
    pe3 = make_positional_encoding(D3, max_len=512, dtype=x3.dtype)
    out3 = positional_encoding_forward(x3, pe3, min_pallas_bytes=0)
    jax.block_until_ready(out3)
    assert jnp.allclose(out3, x3 + pe3[:, :S3, :], atol=1e-6, rtol=1e-6)

    # 4) S*D not a multiple of 128, small S -> full-extent fallback blocks.
    B4, S4, D4 = 2, 12, 20
    x4 = jax.random.normal(jax.random.PRNGKey(3), (B4, S4, D4), dtype=jnp.float32)
    pe4 = make_positional_encoding(D4, max_len=32, dtype=x4.dtype)
    out4 = positional_encoding_forward(x4, pe4, min_pallas_bytes=0)
    jax.block_until_ready(out4)
    assert jnp.allclose(out4, x4 + pe4[:, :S4, :], atol=1e-6, rtol=1e-6)

    # 5) Tiny-problem short-circuit (default threshold: plain fused XLA add).
    out5 = positional_encoding_forward(x, pe)
    jax.block_until_ready(out5)
    assert jnp.allclose(out5, ref, atol=1e-6, rtol=1e-6)

    print("KERNEL_OK")
</pallas_src>

<mosaic_0001>
module attributes {stable_mosaic.version = 11 : i64} {
  func.func @_add_pe_kernel(%arg0: i32, %arg1: memref<2x1x256xf32, #tpu.memory_space<vmem>>, %arg2: memref<1x1x256xf32, #tpu.memory_space<vmem>>, %arg3: memref<2x1x256xf32, #tpu.memory_space<vmem>>) attributes {dimension_semantics = [#tpu.dimension_semantics<parallel>], iteration_bounds = array<i64: 1>, scalar_prefetch = 0 : i64, scratch_operands = 0 : i64, tpu.core_type = #tpu.core_type<tc>, window_params = [{transform_indices = @transform_0, window_bounds = array<i64: 2, 1, 256>}, {transform_indices = @transform_1, window_bounds = array<i64: 1, 1, 256>}, {transform_indices = @transform_2, window_bounds = array<i64: 2, 1, 256>}]} {
    %c0 = arith.constant 0 : index
    %c0_0 = arith.constant 0 : index
    %c0_1 = arith.constant 0 : index
    %0 = vector.load %arg1[%c0, %c0_0, %c0_1] : memref<2x1x256xf32, #tpu.memory_space<vmem>>, vector<2x1x256xf32>
    %c0_2 = arith.constant 0 : index
    %c0_3 = arith.constant 0 : index
    %c0_4 = arith.constant 0 : index
    %1 = vector.load %arg2[%c0_2, %c0_3, %c0_4] : memref<1x1x256xf32, #tpu.memory_space<vmem>>, vector<1x1x256xf32>
    %2 = vector.broadcast %1 : vector<1x1x256xf32> to vector<2x1x256xf32>
    %3 = arith.addf %0, %2 : vector<2x1x256xf32>
    %c0_5 = arith.constant 0 : index
    %c0_6 = arith.constant 0 : index
    %c0_7 = arith.constant 0 : index
    %4 = vector.load %arg3[%c0_5, %c0_6, %c0_7] : memref<2x1x256xf32, #tpu.memory_space<vmem>>, vector<2x1x256xf32>
    tpu.vector_store %arg3[%c0_5, %c0_6, %c0_7], %3 {strides = array<i32>} : memref<2x1x256xf32, #tpu.memory_space<vmem>>, vector<2x1x256xf32>,
    return
  }
  func.func @transform_0(%arg0: i32) -> (i32, i32, i32) {
    %c0_i32 = arith.constant 0 : i32
    %c0_i32_0 = arith.constant 0 : i32
    %c0_i32_1 = arith.constant 0 : i32
    return %c0_i32, %arg0, %c0_i32_0 : i32, i32, i32
  }
  func.func @transform_1(%arg0: i32) -> (i32, i32, i32) {
    %c0_i32 = arith.constant 0 : i32
    %c0_i32_0 = arith.constant 0 : i32
    %c0_i32_1 = arith.constant 0 : i32
    return %c0_i32, %arg0, %c0_i32_0 : i32, i32, i32
  }
  func.func @transform_2(%arg0: i32) -> (i32, i32, i32) {
    %c0_i32 = arith.constant 0 : i32
    %c0_i32_0 = arith.constant 0 : i32
    %c0_i32_1 = arith.constant 0 : i32
    return %c0_i32, %arg0, %c0_i32_0 : i32, i32, i32
  }
}

</mosaic_0001>

<llo_original>
// kernel: tpu_custom_call.1
$region0: #{tpu_custom_call.1}
  #allocation0 [shape = 'u32[]', space=smem, size = 0x4, offset = 0x4, fixed_abs, tag = 'smem constant byte address 0x4 - core index']
  #allocation1 [shape = 'u32[72,128]{1,0:T(1,128)}', space=vmem, size = 0x9000, scoped, tag = 'internal scratch']
  %s0 = inlined_call_operand.hbm [shape: f32[2,1,256], index: 0, kind: input, shape index: {}]
  %s1 = inlined_call_operand.hbm [shape: f32[1,1,256], index: 1, kind: input, shape index: {}]
  %s2 = inlined_call_operand.hbm [shape: f32[2,1,256], index: 2, kind: output, shape index: {}]
  %s3 = sld [smem:[#allocation0]]
  $region26: #{tpu_custom_call.1} parent=0
    _
  %s5 = ssub.s32 1, %s3
  %s6 = scalar_select 0, %s5, %s3
  $region1: #{tpu_custom_call.1} parent=0
    #allocation2 [shape = 'u8[2048]{0}', space=vmem, size = 0x800, scoped, tag = 'input window, operand 0, single buffered']
    #allocation3 [shape = 's32[1]{0}', space=sflag, size = 0x4, scoped, tag = 'scoped memory for tpu_custom_call.1']
    #allocation4 [shape = 's32[1]{0}', space=sflag, size = 0x4, scoped, tag = 'scoped memory for tpu_custom_call.1']
    #allocation5 [shape = 'u8[1024]{0}', space=vmem, size = 0x400, scoped, tag = 'input window, operand 1, single buffered']
    #allocation6 [shape = 's32[1]{0}', space=sflag, size = 0x4, scoped, tag = 'scoped memory for tpu_custom_call.1']
    #allocation7 [shape = 'u8[2048]{0}', space=vmem, size = 0x800, scoped, tag = 'output window, operand 0, single buffered']
    %7 = vsyncpa [#allocation3], 0
    %8 = vsyncpa [#allocation6], 0
    %9 = vsyncpa [#allocation4], 0
    // Predicated region
    $region2: #{tpu_custom_call.1} parent=1 // pred_check
      _
    $region3: #{tpu_custom_call.1} parent=1 // pred_check_branch
      %11 = sbr.rel (0) target = $region5
    $region4: #{tpu_custom_call.1} parent=1 // pred_region
      %13 = vsyncadd [#allocation3], 0
      %s14 = sshll.u32 %s0, 4
      %s15 = int_to_ptr.hbm [resolvable:$true] %s14
      %s16 = sshll.u32 [#allocation2], 4
      %s17 = int_to_ptr.vmem [resolvable:$true] %s16
      %22 = dma.hbm_to_vmem [thread:$0]  %s15, 64, %s17, [#allocation3], 32, 32, 2
    $region5: #{tpu_custom_call.1} parent=1 // pred_fallthru
      _
    // Predicated region
    $region6: #{tpu_custom_call.1} parent=1 // pred_check
      _
    $region7: #{tpu_custom_call.1} parent=1 // pred_check_branch
      %24 = sbr.rel (0) target = $region9
    $region8: #{tpu_custom_call.1} parent=1 // pred_region
      %26 = vsyncadd [#allocation6], 0
      %s28 = sshll.u32 %s1, 4
      %s29 = int_to_ptr.hbm [resolvable:$true] %s28
      %s30 = sshll.u32 [#allocation5], 4
      %s31 = int_to_ptr.vmem [resolvable:$true] %s30
      %33 = dma.hbm_to_vmem [thread:$0]  %s29, 32, %s31, [#allocation6]
    $region9: #{tpu_custom_call.1} parent=1 // pred_fallthru
      _
    // Predicated region
    $region10: #{tpu_custom_call.1} parent=1 // pred_check
      _
    $region11: #{tpu_custom_call.1} parent=1 // pred_check_branch
      %35 = sbr.rel (0) target = $region13
    $region12: #{tpu_custom_call.1} parent=1 // pred_region
      %37 = dma.done [#allocation3], 64
    $region13: #{tpu_custom_call.1} parent=1 // pred_fallthru
      _
    // Predicated region
    $region14: #{tpu_custom_call.1} parent=1 // pred_check
      _
    $region15: #{tpu_custom_call.1} parent=1 // pred_check_branch
      %39 = sbr.rel (0) target = $region17
    $region16: #{tpu_custom_call.1} parent=1 // pred_region
      %41 = dma.done [#allocation6], 32
    $region17: #{tpu_custom_call.1} parent=1 // pred_fallthru
      _
    %v42 = vld [vmem:[#allocation2] sm:$0x3]
    %v43 = vld [vmem:[#allocation2 + $0x2] sm:$0x3]
    %v44 = vld [vmem:[#allocation5] sm:$0x3]
    %v45 = vadd.f32 %v42, %v44
    %v46 = vadd.f32 %v43, %v44
    %v47 = vlaneseq
    %vm48 = vcmp.ge.s32.totalorder %v47, 0
    %vm49 = vcmp.lt.s32.totalorder %v47, 256
    %vm50 = vmand %vm48, %vm49
    %51 = vst.msk [vmem:[#allocation7] sm:$0x3] %vm50, %v45
    %52 = vst.msk [vmem:[#allocation7 + $0x2] sm:$0x3] %vm50, %v46
    // Predicated region
    $region18: #{tpu_custom_call.1} parent=1 // pred_check
      _
    $region19: #{tpu_custom_call.1} parent=1 // pred_check_branch
      %54 = sbr.rel (0) target = $region21
    $region20: #{tpu_custom_call.1} parent=1 // pred_region
      %56 = vsyncadd [#allocation4], 0
      %s57 = sshll.u32 [#allocation7], 4
      %s58 = int_to_ptr.vmem [resolvable:$true] %s57
      %s59 = sshll.u32 %s2, 4
      %s60 = int_to_ptr.hbm [resolvable:$true] %s59
      %65 = dma.vmem_to_hbm [thread:$0]  %s58, 64, %s60, [#allocation4], 32, 32, 2
    $region21: #{tpu_custom_call.1} parent=1 // pred_fallthru
      _
    // Predicated region
    $region22: #{tpu_custom_call.1} parent=1 // pred_check
      _
    $region23: #{tpu_custom_call.1} parent=1 // pred_check_branch
      %67 = sbr.rel (0) target = $region25
    $region24: #{tpu_custom_call.1} parent=1 // pred_region
      %69 = dma.done [#allocation4], 64
    $region25: #{tpu_custom_call.1} parent=1 // pred_fallthru
      _
    %70 = vsyncpa [#allocation3], 1
    %71 = vsyncpa [#allocation6], 1
    %72 = vsyncpa [#allocation4], 1

</llo_original>
